<compile_context>
chip_gen: v7x
topology: tpu7x:2x2x1
jax: 0.10.0
libtpu: 0.0.40
codegen_flags: <defaults>
</compile_context>

<pallas_src>
import functools

import jax
import jax.numpy as jnp
from jax.experimental import pallas as pl
from jax.experimental.pallas import tpu as pltpu

HIDDEN = 128
LANE = 128
SUBLANE = 8


def _round_up(x, m):
    return (x + m - 1) // m * m


def _linear(x_f32, w_ref, b_ref):
    # x: (TB, in) f32, w_ref: (in, out) bf16, b_ref: (1, out) f32.
    # bf16 MXU operands, f32 accumulation; bias add stays f32 on the VPU.
    return jnp.dot(x_f32.astype(jnp.bfloat16), w_ref[...],
                   preferred_element_type=jnp.float32) + b_ref[...]


def actor_resnet9_kernel(
    x_ref,
    wfc_ref, bfc_ref,
    w11_ref, b11_ref, w12_ref, b12_ref,
    w21_ref, b21_ref, w22_ref, b22_ref,
    w31_ref, b31_ref, w32_ref, b32_ref,
    wout_ref, bout_ref,
    o_ref,
):
    x = x_ref[...].astype(jnp.float32)

    # input projection + relu
    x = jnp.maximum(_linear(x, wfc_ref, bfc_ref), 0.0)

    # residual block 1
    h = jnp.maximum(_linear(x, w11_ref, b11_ref), 0.0)
    x = jnp.maximum(_linear(h, w12_ref, b12_ref) + x, 0.0)

    # residual block 2
    h = jnp.maximum(_linear(x, w21_ref, b21_ref), 0.0)
    x = jnp.maximum(_linear(h, w22_ref, b22_ref) + x, 0.0)

    # residual block 3
    h = jnp.maximum(_linear(x, w31_ref, b31_ref), 0.0)
    x = jnp.maximum(_linear(h, w32_ref, b32_ref) + x, 0.0)

    # output head + sigmoid via tanh identity (single EUP op, no divide):
    #   sigmoid(z) = 0.5 * (tanh(z / 2) + 1)
    logits = _linear(x, wout_ref, bout_ref)
    o_ref[...] = (0.5 * jnp.tanh(0.5 * logits) + 0.5).astype(o_ref.dtype)


def _pick_tb(B):
    """Batch tile: multiple of 8, <= 512, prefer >= 2 grid steps (v7x dual-TC sharding),
    and cap padded-row waste at ~12.5%."""
    b8 = _round_up(B, SUBLANE)
    if b8 <= 2 * SUBLANE:
        return b8
    tb = min(512, _round_up(pl.cdiv(b8, 2), SUBLANE))
    while tb > SUBLANE:
        b_pad = _round_up(B, tb)
        if 8 * (b_pad - B) <= b_pad:   # waste <= 12.5%
            break
        tb = _round_up(tb // 2, SUBLANE)
    return tb


@functools.partial(jax.jit, static_argnames=("tb",))
def actor_resnet9(state, params, tb=None):
    """state: (B, in_dim) f32. params: flat tuple of 16 arrays (8 weight/bias pairs)."""
    B, in_dim = state.shape
    out_dim = params[-1].shape[-1]
    out_pad = _round_up(out_dim, LANE)   # lane-dense output store (unmasked vst)

    if tb is None:
        tb = _pick_tb(B)
    else:
        tb = _round_up(max(int(tb), SUBLANE), SUBLANE)   # keep (8,128) tiling legal
    b_pad = _round_up(B, tb)
    grid = (b_pad // tb,)

    # Batch padding only; the feature dim stays unpadded (no HBM copy / DMA inflation).
    xs = jnp.pad(state.astype(jnp.float32), ((0, b_pad - B), (0, 0)))

    (wfc, bfc, w11, b11, w12, b12, w21, b21,
     w22, b22, w31, b31, w32, b32, wout, bout) = params

    # Weights -> bf16 once (MXU-native operands, half the resident VMEM); biases stay f32.
    bf16 = lambda w: w.astype(jnp.bfloat16)
    wout_p = jnp.pad(wout, ((0, 0), (0, out_pad - out_dim)))
    bout_p = jnp.pad(bout, ((0, 0), (0, out_pad - out_dim)))
    kparams = (bf16(wfc), bfc,
               bf16(w11), b11, bf16(w12), b12,
               bf16(w21), b21, bf16(w22), b22,
               bf16(w31), b31, bf16(w32), b32,
               bf16(wout_p), bout_p)

    # Weights/biases: constant block index -> stay resident in VMEM across grid steps.
    param_specs = [pl.BlockSpec(p.shape, lambda i: (0, 0)) for p in kparams]
    in_specs = [pl.BlockSpec((tb, in_dim), lambda i: (i, 0))] + param_specs
    out_spec = pl.BlockSpec((tb, out_pad), lambda i: (i, 0))

    param_bytes = sum(int(p.size) * p.dtype.itemsize for p in kparams)
    flops = 2 * b_pad * (in_dim * HIDDEN + 6 * HIDDEN * HIDDEN + HIDDEN * out_pad)
    cost = pl.CostEstimate(
        flops=flops,
        transcendentals=b_pad * out_pad,
        bytes_accessed=param_bytes + b_pad * (in_dim + out_pad) * 4,
    )

    out = pl.pallas_call(
        actor_resnet9_kernel,
        out_shape=jax.ShapeDtypeStruct((b_pad, out_pad), jnp.float32),
        grid=grid,
        in_specs=in_specs,
        out_specs=out_spec,
        compiler_params=pltpu.CompilerParams(
            dimension_semantics=("parallel",),
            vmem_limit_bytes=32 * 1024 * 1024,  # ~2-4 MB actually used; safe on v5e/v6e/v7x
        ),
        cost_estimate=cost,
    )(xs, *kparams)

    return out[:B, :out_dim]


def init_params(key, in_dim, out_dim, init_w=0.003):
    """nn.Linear-style init (uniform +/- 1/sqrt(fan_in)); output layer uniform(-init_w, init_w).
    Weights stored as (in_features, out_features)."""
    keys = jax.random.split(key, 16)

    def lin(kw, kb, fan_in, fan_out, bound=None):
        if bound is None:
            bound = 1.0 / jnp.sqrt(float(fan_in))
        w = jax.random.uniform(kw, (fan_in, fan_out), jnp.float32, -bound, bound)
        b = jax.random.uniform(kb, (1, fan_out), jnp.float32, -bound, bound)
        return w, b

    wfc, bfc = lin(keys[0], keys[1], in_dim, HIDDEN)
    w11, b11 = lin(keys[2], keys[3], HIDDEN, HIDDEN)
    w12, b12 = lin(keys[4], keys[5], HIDDEN, HIDDEN)
    w21, b21 = lin(keys[6], keys[7], HIDDEN, HIDDEN)
    w22, b22 = lin(keys[8], keys[9], HIDDEN, HIDDEN)
    w31, b31 = lin(keys[10], keys[11], HIDDEN, HIDDEN)
    w32, b32 = lin(keys[12], keys[13], HIDDEN, HIDDEN)
    wout, bout = lin(keys[14], keys[15], HIDDEN, out_dim, bound=init_w)

    return (wfc, bfc, w11, b11, w12, b12, w21, b21,
            w22, b22, w31, b31, w32, b32, wout, bout)


def reference_forward(state, params):
    """Pure-JAX f32 reference of the same forward pass (exact sigmoid)."""
    (wfc, bfc, w11, b11, w12, b12, w21, b21,
     w22, b22, w31, b31, w32, b32, wout, bout) = params
    x = jax.nn.relu(state @ wfc + bfc)
    for (wa, ba, wb, bb) in ((w11, b11, w12, b12),
                             (w21, b21, w22, b22),
                             (w31, b31, w32, b32)):
        h = jax.nn.relu(x @ wa + ba)
        x = jax.nn.relu(h @ wb + bb + x)
    logits = x @ wout + bout
    return jax.nn.sigmoid(logits)


if __name__ == "__main__":
    key = jax.random.PRNGKey(0)
    k_x, k_p = jax.random.split(key)

    B, IN_DIM, OUT_DIM = 2, 16, 8
    state = jax.random.normal(k_x, (B, IN_DIM), dtype=jnp.float32)
    params = init_params(k_p, IN_DIM, OUT_DIM)

    out = jax.block_until_ready(actor_resnet9(state, params))
    ref = reference_forward(state, params)

    assert out.shape == (B, OUT_DIM)
    # bf16 MXU operands -> slightly looser tolerance vs the f32 reference.
    assert jnp.allclose(out, ref, atol=1e-2, rtol=0.0), "mismatch vs JAX reference"

    print("KERNEL_OK")
</pallas_src>

<mosaic_0001>
module attributes {stable_mosaic.version = 11 : i64} {
  func.func @actor_resnet9_kernel(%arg0: i32, %arg1: memref<8x16xf32, #tpu.memory_space<vmem>>, %arg2: memref<16x128xbf16, #tpu.memory_space<vmem>>, %arg3: memref<1x128xf32, #tpu.memory_space<vmem>>, %arg4: memref<128x128xbf16, #tpu.memory_space<vmem>>, %arg5: memref<1x128xf32, #tpu.memory_space<vmem>>, %arg6: memref<128x128xbf16, #tpu.memory_space<vmem>>, %arg7: memref<1x128xf32, #tpu.memory_space<vmem>>, %arg8: memref<128x128xbf16, #tpu.memory_space<vmem>>, %arg9: memref<1x128xf32, #tpu.memory_space<vmem>>, %arg10: memref<128x128xbf16, #tpu.memory_space<vmem>>, %arg11: memref<1x128xf32, #tpu.memory_space<vmem>>, %arg12: memref<128x128xbf16, #tpu.memory_space<vmem>>, %arg13: memref<1x128xf32, #tpu.memory_space<vmem>>, %arg14: memref<128x128xbf16, #tpu.memory_space<vmem>>, %arg15: memref<1x128xf32, #tpu.memory_space<vmem>>, %arg16: memref<128x128xbf16, #tpu.memory_space<vmem>>, %arg17: memref<1x128xf32, #tpu.memory_space<vmem>>, %arg18: memref<8x128xf32, #tpu.memory_space<vmem>>) attributes {dimension_semantics = [#tpu.dimension_semantics<parallel>], iteration_bounds = array<i64: 1>, scalar_prefetch = 0 : i64, scratch_operands = 0 : i64, tpu.core_type = #tpu.core_type<tc>, window_params = [{transform_indices = @transform_0, window_bounds = array<i64: 8, 16>}, {pipeline_mode = #tpu.pipeline_mode<synchronous>, transform_indices = @transform_1, window_bounds = array<i64: 16, 128>}, {pipeline_mode = #tpu.pipeline_mode<synchronous>, transform_indices = @transform_2, window_bounds = array<i64: 1, 128>}, {pipeline_mode = #tpu.pipeline_mode<synchronous>, transform_indices = @transform_3, window_bounds = array<i64: 128, 128>}, {pipeline_mode = #tpu.pipeline_mode<synchronous>, transform_indices = @transform_4, window_bounds = array<i64: 1, 128>}, {pipeline_mode = #tpu.pipeline_mode<synchronous>, transform_indices = @transform_5, window_bounds = array<i64: 128, 128>}, {pipeline_mode = #tpu.pipeline_mode<synchronous>, transform_indices = @transform_6, window_bounds = array<i64: 1, 128>}, {pipeline_mode = #tpu.pipeline_mode<synchronous>, transform_indices = @transform_7, window_bounds = array<i64: 128, 128>}, {pipeline_mode = #tpu.pipeline_mode<synchronous>, transform_indices = @transform_8, window_bounds = array<i64: 1, 128>}, {pipeline_mode = #tpu.pipeline_mode<synchronous>, transform_indices = @transform_9, window_bounds = array<i64: 128, 128>}, {pipeline_mode = #tpu.pipeline_mode<synchronous>, transform_indices = @transform_10, window_bounds = array<i64: 1, 128>}, {pipeline_mode = #tpu.pipeline_mode<synchronous>, transform_indices = @transform_11, window_bounds = array<i64: 128, 128>}, {pipeline_mode = #tpu.pipeline_mode<synchronous>, transform_indices = @transform_12, window_bounds = array<i64: 1, 128>}, {pipeline_mode = #tpu.pipeline_mode<synchronous>, transform_indices = @transform_13, window_bounds = array<i64: 128, 128>}, {pipeline_mode = #tpu.pipeline_mode<synchronous>, transform_indices = @transform_14, window_bounds = array<i64: 1, 128>}, {pipeline_mode = #tpu.pipeline_mode<synchronous>, transform_indices = @transform_15, window_bounds = array<i64: 128, 128>}, {pipeline_mode = #tpu.pipeline_mode<synchronous>, transform_indices = @transform_16, window_bounds = array<i64: 1, 128>}, {transform_indices = @transform_17, window_bounds = array<i64: 8, 128>}]} {
    %c0 = arith.constant 0 : index
    %c0_0 = arith.constant 0 : index
    %0 = vector.load %arg1[%c0, %c0_0] : memref<8x16xf32, #tpu.memory_space<vmem>>, vector<8x16xf32>
    %1 = arith.truncf %0 : vector<8x16xf32> to vector<8x16xbf16>
    %c0_1 = arith.constant 0 : index
    %c0_2 = arith.constant 0 : index
    %2 = vector.load %arg2[%c0_1, %c0_2] : memref<16x128xbf16, #tpu.memory_space<vmem>>, vector<16x128xbf16>
    %cst = arith.constant dense<0.000000e+00> : vector<8x128xf32>
    %3 = tpu.matmul %1, %2, %cst {dimension_numbers = #tpu.dot_dimension_numbers<[1], [0], [0], [1], [0, 0, 1, 1], [], []>} : vector<8x16xbf16>, vector<16x128xbf16>, vector<8x128xf32> -> vector<8x128xf32>
    %c0_3 = arith.constant 0 : index
    %c0_4 = arith.constant 0 : index
    %4 = vector.load %arg3[%c0_3, %c0_4] : memref<1x128xf32, #tpu.memory_space<vmem>>, vector<1x128xf32>
    %5 = vector.broadcast %4 : vector<1x128xf32> to vector<8x128xf32>
    %6 = arith.addf %3, %5 : vector<8x128xf32>
    %cst_5 = arith.constant 0.000000e+00 : f32
    %7 = vector.broadcast %cst_5 : f32 to vector<8x128xf32>
    %8 = arith.maximumf %6, %7 : vector<8x128xf32>
    %9 = arith.truncf %8 : vector<8x128xf32> to vector<8x128xbf16>
    %c0_6 = arith.constant 0 : index
    %c0_7 = arith.constant 0 : index
    %10 = vector.load %arg4[%c0_6, %c0_7] : memref<128x128xbf16, #tpu.memory_space<vmem>>, vector<128x128xbf16>
    %cst_8 = arith.constant dense<0.000000e+00> : vector<8x128xf32>
    %11 = tpu.matmul %9, %10, %cst_8 {dimension_numbers = #tpu.dot_dimension_numbers<[1], [0], [0], [1], [0, 0, 1, 1], [], []>} : vector<8x128xbf16>, vector<128x128xbf16>, vector<8x128xf32> -> vector<8x128xf32>
    %c0_9 = arith.constant 0 : index
    %c0_10 = arith.constant 0 : index
    %12 = vector.load %arg5[%c0_9, %c0_10] : memref<1x128xf32, #tpu.memory_space<vmem>>, vector<1x128xf32>
    %13 = vector.broadcast %12 : vector<1x128xf32> to vector<8x128xf32>
    %14 = arith.addf %11, %13 : vector<8x128xf32>
    %cst_11 = arith.constant 0.000000e+00 : f32
    %15 = vector.broadcast %cst_11 : f32 to vector<8x128xf32>
    %16 = arith.maximumf %14, %15 : vector<8x128xf32>
    %17 = arith.truncf %16 : vector<8x128xf32> to vector<8x128xbf16>
    %c0_12 = arith.constant 0 : index
    %c0_13 = arith.constant 0 : index
    %18 = vector.load %arg6[%c0_12, %c0_13] : memref<128x128xbf16, #tpu.memory_space<vmem>>, vector<128x128xbf16>
    %cst_14 = arith.constant dense<0.000000e+00> : vector<8x128xf32>
    %19 = tpu.matmul %17, %18, %cst_14 {dimension_numbers = #tpu.dot_dimension_numbers<[1], [0], [0], [1], [0, 0, 1, 1], [], []>} : vector<8x128xbf16>, vector<128x128xbf16>, vector<8x128xf32> -> vector<8x128xf32>
    %c0_15 = arith.constant 0 : index
    %c0_16 = arith.constant 0 : index
    %20 = vector.load %arg7[%c0_15, %c0_16] : memref<1x128xf32, #tpu.memory_space<vmem>>, vector<1x128xf32>
    %21 = vector.broadcast %20 : vector<1x128xf32> to vector<8x128xf32>
    %22 = arith.addf %19, %21 : vector<8x128xf32>
    %23 = arith.addf %22, %8 : vector<8x128xf32>
    %cst_17 = arith.constant 0.000000e+00 : f32
    %24 = vector.broadcast %cst_17 : f32 to vector<8x128xf32>
    %25 = arith.maximumf %23, %24 : vector<8x128xf32>
    %26 = arith.truncf %25 : vector<8x128xf32> to vector<8x128xbf16>
    %c0_18 = arith.constant 0 : index
    %c0_19 = arith.constant 0 : index
    %27 = vector.load %arg8[%c0_18, %c0_19] : memref<128x128xbf16, #tpu.memory_space<vmem>>, vector<128x128xbf16>
    %cst_20 = arith.constant dense<0.000000e+00> : vector<8x128xf32>
    %28 = tpu.matmul %26, %27, %cst_20 {dimension_numbers = #tpu.dot_dimension_numbers<[1], [0], [0], [1], [0, 0, 1, 1], [], []>} : vector<8x128xbf16>, vector<128x128xbf16>, vector<8x128xf32> -> vector<8x128xf32>
    %c0_21 = arith.constant 0 : index
    %c0_22 = arith.constant 0 : index
    %29 = vector.load %arg9[%c0_21, %c0_22] : memref<1x128xf32, #tpu.memory_space<vmem>>, vector<1x128xf32>
    %30 = vector.broadcast %29 : vector<1x128xf32> to vector<8x128xf32>
    %31 = arith.addf %28, %30 : vector<8x128xf32>
    %cst_23 = arith.constant 0.000000e+00 : f32
    %32 = vector.broadcast %cst_23 : f32 to vector<8x128xf32>
    %33 = arith.maximumf %31, %32 : vector<8x128xf32>
    %34 = arith.truncf %33 : vector<8x128xf32> to vector<8x128xbf16>
    %c0_24 = arith.constant 0 : index
    %c0_25 = arith.constant 0 : index
    %35 = vector.load %arg10[%c0_24, %c0_25] : memref<128x128xbf16, #tpu.memory_space<vmem>>, vector<128x128xbf16>
    %cst_26 = arith.constant dense<0.000000e+00> : vector<8x128xf32>
    %36 = tpu.matmul %34, %35, %cst_26 {dimension_numbers = #tpu.dot_dimension_numbers<[1], [0], [0], [1], [0, 0, 1, 1], [], []>} : vector<8x128xbf16>, vector<128x128xbf16>, vector<8x128xf32> -> vector<8x128xf32>
    %c0_27 = arith.constant 0 : index
    %c0_28 = arith.constant 0 : index
    %37 = vector.load %arg11[%c0_27, %c0_28] : memref<1x128xf32, #tpu.memory_space<vmem>>, vector<1x128xf32>
    %38 = vector.broadcast %37 : vector<1x128xf32> to vector<8x128xf32>
    %39 = arith.addf %36, %38 : vector<8x128xf32>
    %40 = arith.addf %39, %25 : vector<8x128xf32>
    %cst_29 = arith.constant 0.000000e+00 : f32
    %41 = vector.broadcast %cst_29 : f32 to vector<8x128xf32>
    %42 = arith.maximumf %40, %41 : vector<8x128xf32>
    %43 = arith.truncf %42 : vector<8x128xf32> to vector<8x128xbf16>
    %c0_30 = arith.constant 0 : index
    %c0_31 = arith.constant 0 : index
    %44 = vector.load %arg12[%c0_30, %c0_31] : memref<128x128xbf16, #tpu.memory_space<vmem>>, vector<128x128xbf16>
    %cst_32 = arith.constant dense<0.000000e+00> : vector<8x128xf32>
    %45 = tpu.matmul %43, %44, %cst_32 {dimension_numbers = #tpu.dot_dimension_numbers<[1], [0], [0], [1], [0, 0, 1, 1], [], []>} : vector<8x128xbf16>, vector<128x128xbf16>, vector<8x128xf32> -> vector<8x128xf32>
    %c0_33 = arith.constant 0 : index
    %c0_34 = arith.constant 0 : index
    %46 = vector.load %arg13[%c0_33, %c0_34] : memref<1x128xf32, #tpu.memory_space<vmem>>, vector<1x128xf32>
    %47 = vector.broadcast %46 : vector<1x128xf32> to vector<8x128xf32>
    %48 = arith.addf %45, %47 : vector<8x128xf32>
    %cst_35 = arith.constant 0.000000e+00 : f32
    %49 = vector.broadcast %cst_35 : f32 to vector<8x128xf32>
    %50 = arith.maximumf %48, %49 : vector<8x128xf32>
    %51 = arith.truncf %50 : vector<8x128xf32> to vector<8x128xbf16>
    %c0_36 = arith.constant 0 : index
    %c0_37 = arith.constant 0 : index
    %52 = vector.load %arg14[%c0_36, %c0_37] : memref<128x128xbf16, #tpu.memory_space<vmem>>, vector<128x128xbf16>
    %cst_38 = arith.constant dense<0.000000e+00> : vector<8x128xf32>
    %53 = tpu.matmul %51, %52, %cst_38 {dimension_numbers = #tpu.dot_dimension_numbers<[1], [0], [0], [1], [0, 0, 1, 1], [], []>} : vector<8x128xbf16>, vector<128x128xbf16>, vector<8x128xf32> -> vector<8x128xf32>
    %c0_39 = arith.constant 0 : index
    %c0_40 = arith.constant 0 : index
    %54 = vector.load %arg15[%c0_39, %c0_40] : memref<1x128xf32, #tpu.memory_space<vmem>>, vector<1x128xf32>
    %55 = vector.broadcast %54 : vector<1x128xf32> to vector<8x128xf32>
    %56 = arith.addf %53, %55 : vector<8x128xf32>
    %57 = arith.addf %56, %42 : vector<8x128xf32>
    %cst_41 = arith.constant 0.000000e+00 : f32
    %58 = vector.broadcast %cst_41 : f32 to vector<8x128xf32>
    %59 = arith.maximumf %57, %58 : vector<8x128xf32>
    %60 = arith.truncf %59 : vector<8x128xf32> to vector<8x128xbf16>
    %c0_42 = arith.constant 0 : index
    %c0_43 = arith.constant 0 : index
    %61 = vector.load %arg16[%c0_42, %c0_43] : memref<128x128xbf16, #tpu.memory_space<vmem>>, vector<128x128xbf16>
    %cst_44 = arith.constant dense<0.000000e+00> : vector<8x128xf32>
    %62 = tpu.matmul %60, %61, %cst_44 {dimension_numbers = #tpu.dot_dimension_numbers<[1], [0], [0], [1], [0, 0, 1, 1], [], []>} : vector<8x128xbf16>, vector<128x128xbf16>, vector<8x128xf32> -> vector<8x128xf32>
    %c0_45 = arith.constant 0 : index
    %c0_46 = arith.constant 0 : index
    %63 = vector.load %arg17[%c0_45, %c0_46] : memref<1x128xf32, #tpu.memory_space<vmem>>, vector<1x128xf32>
    %64 = vector.broadcast %63 : vector<1x128xf32> to vector<8x128xf32>
    %65 = arith.addf %62, %64 : vector<8x128xf32>
    %cst_47 = arith.constant 5.000000e-01 : f32
    %66 = vector.broadcast %cst_47 : f32 to vector<8x128xf32>
    %67 = arith.mulf %66, %65 : vector<8x128xf32>
    %68 = math.tanh %67 : vector<8x128xf32>
    %cst_48 = arith.constant 5.000000e-01 : f32
    %69 = vector.broadcast %cst_48 : f32 to vector<8x128xf32>
    %70 = arith.mulf %69, %68 : vector<8x128xf32>
    %cst_49 = arith.constant 5.000000e-01 : f32
    %71 = vector.broadcast %cst_49 : f32 to vector<8x128xf32>
    %72 = arith.addf %70, %71 : vector<8x128xf32>
    %c0_50 = arith.constant 0 : index
    %c0_51 = arith.constant 0 : index
    %73 = vector.load %arg18[%c0_50, %c0_51] : memref<8x128xf32, #tpu.memory_space<vmem>>, vector<8x128xf32>
    tpu.vector_store %arg18[%c0_50, %c0_51], %72 {strides = array<i32>} : memref<8x128xf32, #tpu.memory_space<vmem>>, vector<8x128xf32>,
    return
  }
  func.func @transform_0(%arg0: i32) -> (i32, i32) {
    %c0_i32 = arith.constant 0 : i32
    %c0_i32_0 = arith.constant 0 : i32
    return %arg0, %c0_i32 : i32, i32
  }
  func.func @transform_1(%arg0: i32) -> (i32, i32) {
    %c0_i32 = arith.constant 0 : i32
    %c0_i32_0 = arith.constant 0 : i32
    %c0_i32_1 = arith.constant 0 : i32
    return %c0_i32, %c0_i32_0 : i32, i32
  }
  func.func @transform_2(%arg0: i32) -> (i32, i32) {
    %c0_i32 = arith.constant 0 : i32
    %c0_i32_0 = arith.constant 0 : i32
    %c0_i32_1 = arith.constant 0 : i32
    return %c0_i32, %c0_i32_0 : i32, i32
  }
  func.func @transform_3(%arg0: i32) -> (i32, i32) {
    %c0_i32 = arith.constant 0 : i32
    %c0_i32_0 = arith.constant 0 : i32
    %c0_i32_1 = arith.constant 0 : i32
    return %c0_i32, %c0_i32_0 : i32, i32
  }
  func.func @transform_4(%arg0: i32) -> (i32, i32) {
    %c0_i32 = arith.constant 0 : i32
    %c0_i32_0 = arith.constant 0 : i32
    %c0_i32_1 = arith.constant 0 : i32
    return %c0_i32, %c0_i32_0 : i32, i32
  }
  func.func @transform_5(%arg0: i32) -> (i32, i32) {
    %c0_i32 = arith.constant 0 : i32
    %c0_i32_0 = arith.constant 0 : i32
    %c0_i32_1 = arith.constant 0 : i32
    return %c0_i32, %c0_i32_0 : i32, i32
  }
  func.func @transform_6(%arg0: i32) -> (i32, i32) {
    %c0_i32 = arith.constant 0 : i32
    %c0_i32_0 = arith.constant 0 : i32
    %c0_i32_1 = arith.constant 0 : i32
    return %c0_i32, %c0_i32_0 : i32, i32
  }
  func.func @transform_7(%arg0: i32) -> (i32, i32) {
    %c0_i32 = arith.constant 0 : i32
    %c0_i32_0 = arith.constant 0 : i32
    %c0_i32_1 = arith.constant 0 : i32
    return %c0_i32, %c0_i32_0 : i32, i32
  }
  func.func @transform_8(%arg0: i32) -> (i32, i32) {
    %c0_i32 = arith.constant 0 : i32
    %c0_i32_0 = arith.constant 0 : i32
    %c0_i32_1 = arith.constant 0 : i32
    return %c0_i32, %c0_i32_0 : i32, i32
  }
  func.func @transform_9(%arg0: i32) -> (i32, i32) {
    %c0_i32 = arith.constant 0 : i32
    %c0_i32_0 = arith.constant 0 : i32
    %c0_i32_1 = arith.constant 0 : i32
    return %c0_i32, %c0_i32_0 : i32, i32
  }
  func.func @transform_10(%arg0: i32) -> (i32, i32) {
    %c0_i32 = arith.constant 0 : i32
    %c0_i32_0 = arith.constant 0 : i32
    %c0_i32_1 = arith.constant 0 : i32
    return %c0_i32, %c0_i32_0 : i32, i32
  }
  func.func @transform_11(%arg0: i32) -> (i32, i32) {
    %c0_i32 = arith.constant 0 : i32
    %c0_i32_0 = arith.constant 0 : i32
    %c0_i32_1 = arith.constant 0 : i32
    return %c0_i32, %c0_i32_0 : i32, i32
  }
  func.func @transform_12(%arg0: i32) -> (i32, i32) {
    %c0_i32 = arith.constant 0 : i32
    %c0_i32_0 = arith.constant 0 : i32
    %c0_i32_1 = arith.constant 0 : i32
    return %c0_i32, %c0_i32_0 : i32, i32
  }
  func.func @transform_13(%arg0: i32) -> (i32, i32) {
    %c0_i32 = arith.constant 0 : i32
    %c0_i32_0 = arith.constant 0 : i32
    %c0_i32_1 = arith.constant 0 : i32
    return %c0_i32, %c0_i32_0 : i32, i32
  }
  func.func @transform_14(%arg0: i32) -> (i32, i32) {
    %c0_i32 = arith.constant 0 : i32
    %c0_i32_0 = arith.constant 0 : i32
    %c0_i32_1 = arith.constant 0 : i32
    return %c0_i32, %c0_i32_0 : i32, i32
  }
  func.func @transform_15(%arg0: i32) -> (i32, i32) {
    %c0_i32 = arith.constant 0 : i32
    %c0_i32_0 = arith.constant 0 : i32
    %c0_i32_1 = arith.constant 0 : i32
    return %c0_i32, %c0_i32_0 : i32, i32
  }
  func.func @transform_16(%arg0: i32) -> (i32, i32) {
    %c0_i32 = arith.constant 0 : i32
    %c0_i32_0 = arith.constant 0 : i32
    %c0_i32_1 = arith.constant 0 : i32
    return %c0_i32, %c0_i32_0 : i32, i32
  }
  func.func @transform_17(%arg0: i32) -> (i32, i32) {
    %c0_i32 = arith.constant 0 : i32
    %c0_i32_0 = arith.constant 0 : i32
    return %arg0, %c0_i32 : i32, i32
  }
}

</mosaic_0001>

<llo_original>
// kernel: actor_resnet9.1
$region0: #{actor_resnet9.1}
  #allocation0 [shape = 'u32[]', space=smem, size = 0x4, offset = 0x4, fixed_abs, tag = 'smem constant byte address 0x4 - core index']
  #allocation1 [shape = 'u32[144,128]{1,0:T(1,128)}', space=vmem, size = 0x12000, scoped, tag = 'internal scratch']
  %s0 = inlined_call_operand.vmem [shape: f32[8,16], index: 0, kind: input, shape index: {}]
  %s1 = inlined_call_operand.vmem [shape: bf16[16,128], index: 1, kind: input, shape index: {}]
  %s2 = inlined_call_operand.vmem [shape: f32[1,128], index: 2, kind: input, shape index: {}]
  %s3 = inlined_call_operand.vmem [shape: bf16[128,128], index: 3, kind: input, shape index: {}]
  %s4 = inlined_call_operand.vmem [shape: f32[1,128], index: 4, kind: input, shape index: {}]
  %s5 = inlined_call_operand.vmem [shape: bf16[128,128], index: 5, kind: input, shape index: {}]
  %s6 = inlined_call_operand.vmem [shape: f32[1,128], index: 6, kind: input, shape index: {}]
  %s7 = inlined_call_operand.vmem [shape: bf16[128,128], index: 7, kind: input, shape index: {}]
  %s8 = inlined_call_operand.vmem [shape: f32[1,128], index: 8, kind: input, shape index: {}]
  %s9 = inlined_call_operand.vmem [shape: bf16[128,128], index: 9, kind: input, shape index: {}]
  %s10 = inlined_call_operand.vmem [shape: f32[1,128], index: 10, kind: input, shape index: {}]
  %s11 = inlined_call_operand.vmem [shape: bf16[128,128], index: 11, kind: input, shape index: {}]
  %s12 = inlined_call_operand.vmem [shape: f32[1,128], index: 12, kind: input, shape index: {}]
  %s13 = inlined_call_operand.vmem [shape: bf16[128,128], index: 13, kind: input, shape index: {}]
  %s14 = inlined_call_operand.vmem [shape: f32[1,128], index: 14, kind: input, shape index: {}]
  %s15 = inlined_call_operand.vmem [shape: bf16[128,128], index: 15, kind: input, shape index: {}]
  %s16 = inlined_call_operand.vmem [shape: f32[1,128], index: 16, kind: input, shape index: {}]
  %s17 = inlined_call_operand.vmem [shape: f32[8,128], index: 17, kind: output, shape index: {}]
  %s18 = sld [smem:[#allocation0]]
  $region78: #{actor_resnet9.1} parent=0
    _
  %s20 = ssub.s32 1, %s18
  %s21 = scalar_select 0, %s20, %s18
  // Predicated region
  $region2: #{actor_resnet9.1} parent=0 // pred_check
    _
  $region3: #{actor_resnet9.1} parent=0 // pred_check_branch
    %23 = sbr.rel (0) target = $region5
  $region4: #{actor_resnet9.1} parent=0 // pred_region
    _
  $region5: #{actor_resnet9.1} parent=0 // pred_fallthru
    _
  // Predicated region
  $region6: #{actor_resnet9.1} parent=0 // pred_check
    _
  $region7: #{actor_resnet9.1} parent=0 // pred_check_branch
    %25 = sbr.rel (0) target = $region9
  $region8: #{actor_resnet9.1} parent=0 // pred_region
    _
  $region9: #{actor_resnet9.1} parent=0 // pred_fallthru
    _
  // Predicated region
  $region10: #{actor_resnet9.1} parent=0 // pred_check
    _
  $region11: #{actor_resnet9.1} parent=0 // pred_check_branch
    %27 = sbr.rel (0) target = $region13
  $region12: #{actor_resnet9.1} parent=0 // pred_region
    _
  $region13: #{actor_resnet9.1} parent=0 // pred_fallthru
    _
  // Predicated region
  $region14: #{actor_resnet9.1} parent=0 // pred_check
    _
  $region15: #{actor_resnet9.1} parent=0 // pred_check_branch
    %29 = sbr.rel (0) target = $region17
  $region16: #{actor_resnet9.1} parent=0 // pred_region
    _
  $region17: #{actor_resnet9.1} parent=0 // pred_fallthru
    _
  // Predicated region
  $region18: #{actor_resnet9.1} parent=0 // pred_check
    _
  $region19: #{actor_resnet9.1} parent=0 // pred_check_branch
    %31 = sbr.rel (0) target = $region21
  $region20: #{actor_resnet9.1} parent=0 // pred_region
    _
  $region21: #{actor_resnet9.1} parent=0 // pred_fallthru
    _
  // Predicated region
  $region22: #{actor_resnet9.1} parent=0 // pred_check
    _
  $region23: #{actor_resnet9.1} parent=0 // pred_check_branch
    %33 = sbr.rel (0) target = $region25
  $region24: #{actor_resnet9.1} parent=0 // pred_region
    _
  $region25: #{actor_resnet9.1} parent=0 // pred_fallthru
    _
  // Predicated region
  $region26: #{actor_resnet9.1} parent=0 // pred_check
    _
  $region27: #{actor_resnet9.1} parent=0 // pred_check_branch
    %35 = sbr.rel (0) target = $region29
  $region28: #{actor_resnet9.1} parent=0 // pred_region
    _
  $region29: #{actor_resnet9.1} parent=0 // pred_fallthru
    _
  // Predicated region
  $region30: #{actor_resnet9.1} parent=0 // pred_check
    _
  $region31: #{actor_resnet9.1} parent=0 // pred_check_branch
    %37 = sbr.rel (0) target = $region33
  $region32: #{actor_resnet9.1} parent=0 // pred_region
    _
  $region33: #{actor_resnet9.1} parent=0 // pred_fallthru
    _
  // Predicated region
  $region34: #{actor_resnet9.1} parent=0 // pred_check
    _
  $region35: #{actor_resnet9.1} parent=0 // pred_check_branch
    %39 = sbr.rel (0) target = $region37
  $region36: #{actor_resnet9.1} parent=0 // pred_region
    _
  $region37: #{actor_resnet9.1} parent=0 // pred_fallthru
    _
  // Predicated region
  $region38: #{actor_resnet9.1} parent=0 // pred_check
    _
  $region39: #{actor_resnet9.1} parent=0 // pred_check_branch
    %41 = sbr.rel (0) target = $region41
  $region40: #{actor_resnet9.1} parent=0 // pred_region
    _
  $region41: #{actor_resnet9.1} parent=0 // pred_fallthru
    _
  // Predicated region
  $region42: #{actor_resnet9.1} parent=0 // pred_check
    _
  $region43: #{actor_resnet9.1} parent=0 // pred_check_branch
    %43 = sbr.rel (0) target = $region45
  $region44: #{actor_resnet9.1} parent=0 // pred_region
    _
  $region45: #{actor_resnet9.1} parent=0 // pred_fallthru
    _
  // Predicated region
  $region46: #{actor_resnet9.1} parent=0 // pred_check
    _
  $region47: #{actor_resnet9.1} parent=0 // pred_check_branch
    %45 = sbr.rel (0) target = $region49
  $region48: #{actor_resnet9.1} parent=0 // pred_region
    _
  $region49: #{actor_resnet9.1} parent=0 // pred_fallthru
    _
  // Predicated region
  $region50: #{actor_resnet9.1} parent=0 // pred_check
    _
  $region51: #{actor_resnet9.1} parent=0 // pred_check_branch
    %47 = sbr.rel (0) target = $region53
  $region52: #{actor_resnet9.1} parent=0 // pred_region
    _
  $region53: #{actor_resnet9.1} parent=0 // pred_fallthru
    _
  // Predicated region
  $region54: #{actor_resnet9.1} parent=0 // pred_check
    _
  $region55: #{actor_resnet9.1} parent=0 // pred_check_branch
    %49 = sbr.rel (0) target = $region57
  $region56: #{actor_resnet9.1} parent=0 // pred_region
    _
  $region57: #{actor_resnet9.1} parent=0 // pred_fallthru
    _
  // Predicated region
  $region58: #{actor_resnet9.1} parent=0 // pred_check
    _
  $region59: #{actor_resnet9.1} parent=0 // pred_check_branch
    %51 = sbr.rel (0) target = $region61
  $region60: #{actor_resnet9.1} parent=0 // pred_region
    _
  $region61: #{actor_resnet9.1} parent=0 // pred_fallthru
    _
  // Predicated region
  $region62: #{actor_resnet9.1} parent=0 // pred_check
    _
  $region63: #{actor_resnet9.1} parent=0 // pred_check_branch
    %53 = sbr.rel (0) target = $region65
  $region64: #{actor_resnet9.1} parent=0 // pred_region
    _
  $region65: #{actor_resnet9.1} parent=0 // pred_fallthru
    _
  // Predicated region
  $region66: #{actor_resnet9.1} parent=0 // pred_check
    _
  $region67: #{actor_resnet9.1} parent=0 // pred_check_branch
    %55 = sbr.rel (0) target = $region69
  $region68: #{actor_resnet9.1} parent=0 // pred_region
    _
  $region69: #{actor_resnet9.1} parent=0 // pred_fallthru
    _
  %v57 = vld [vmem:[%s0] sm:$0xff]
  %v58 = vpack.c.bf16 %v57, %v57
  %v59 = vld [vmem:[%s1] sm:$0xf]
  %v60 = vld [vmem:[%s1 + $0x4] sm:$0xf]
  %v61 = vld [vmem:[%s2] sm:$0x1]
  %v63 = vlaneseq
  %v64 = vshrl.u32 %v63, 7
  %v65 = vsub.s32 0, %v64
  %v66 = vrot.slane %v61, %v65
  %v70 = vunpack.c.l.b16 %v59
  %v71 = vunpack.c.l.b16 %v60
  %v72 = vpack.c.b16 %v71, %v70
  %vm74 = vcmask 130048
  %v76 = vsel %vm74, %v58, 0
  %78 = vmatprep.subr.bf16.mxu0 0
  %79 = vmatpush1.bf16.msra.mxu0 %v72
  %80 = vmatprep.subr.bf16.mxu0 0
  %81 = vmatpush1.bf16.msra.mxu0 0
  %82 = vmatprep.subr.bf16.mxu0 0
  %83 = vmatpush1.bf16.msra.mxu0 0
  %84 = vmatprep.subr.bf16.mxu0 0
  %85 = vmatpush1.bf16.msra.mxu0 0
  %86 = vmatprep.subr.bf16.mxu0 0
  %87 = vmatpush1.bf16.msra.mxu0 0
  %88 = vmatprep.subr.bf16.mxu0 0
  %89 = vmatpush1.bf16.msra.mxu0 0
  %90 = vmatprep.subr.bf16.mxu0 0
  %91 = vmatpush1.bf16.msra.mxu0 0
  %92 = vmatprep.subr.bf16.mxu0 0
  %93 = vmatpush1.bf16.msra.mxu0 0
  %94 = vmatprep.subr.bf16.mxu0 0
  %95 = vmatpush1.bf16.msra.mxu0 0
  %96 = vmatprep.subr.bf16.mxu0 0
  %97 = vmatpush1.bf16.msra.mxu0 0
  %98 = vmatprep.subr.bf16.mxu0 0
  %99 = vmatpush1.bf16.msra.mxu0 0
  %100 = vmatprep.subr.bf16.mxu0 0
  %101 = vmatpush1.bf16.msra.mxu0 0
  %102 = vmatprep.subr.bf16.mxu0 0
  %103 = vmatpush1.bf16.msra.mxu0 0
  %104 = vmatprep.subr.bf16.mxu0 0
  %105 = vmatpush1.bf16.msra.mxu0 0
  %106 = vmatprep.subr.bf16.mxu0 0
  %107 = vmatpush1.bf16.msra.mxu0 0
  %108 = vmatprep.subr.bf16.mxu0 0
  %109 = vmatpush1.bf16.msra.mxu0 0
  %110 = vmatprep.mubr.bf16.mxu0 0
  %111 = vmatmul.mubr.bf16.gmra.mrb[0].mxu0 %v76
  %v112 = vpop.f32.mrb[0].mxu0
  %v113 = vadd.f32 %v66, %v112
  %v114 = vpop.f32.mrb[0].mxu0
  %v115 = vpop.f32.mrb[0].mxu0
  %v116 = vpop.f32.mrb[0].mxu0
  %117 = vdwg.mxu0
  %v118 = vmax.f32 %v113, 0.0
  %v119 = vpack.c.bf16 %v118, %v118
  %v120 = vld [vmem:[%s3] sm:$0xf]
  %v121 = vld [vmem:[%s3 + $0x4] sm:$0xf]
  %v122 = vld [vmem:[%s3 + $0x8] sm:$0xf]
  %v123 = vld [vmem:[%s3 + $0xc] sm:$0xf]
  %v124 = vld [vmem:[%s3 + $0x10] sm:$0xf]
  %v125 = vld [vmem:[%s3 + $0x14] sm:$0xf]
  %v126 = vld [vmem:[%s3 + $0x18] sm:$0xf]
  %v127 = vld [vmem:[%s3 + $0x1c] sm:$0xf]
  %v128 = vld [vmem:[%s3 + $0x20] sm:$0xf]
  %v129 = vld [vmem:[%s3 + $0x24] sm:$0xf]
  %v130 = vld [vmem:[%s3 + $0x28] sm:$0xf]
  %v131 = vld [vmem:[%s3 + $0x2c] sm:$0xf]
  %v132 = vld [vmem:[%s3 + $0x30] sm:$0xf]
  %v133 = vld [vmem:[%s3 + $0x34] sm:$0xf]
  %v134 = vld [vmem:[%s3 + $0x38] sm:$0xf]
  %v135 = vld [vmem:[%s3 + $0x3c] sm:$0xf]
  %v136 = vld [vmem:[%s4] sm:$0x1]
  %v138 = vlaneseq
  %v139 = vshrl.u32 %v138, 7
  %v140 = vsub.s32 0, %v139
  %v141 = vrot.slane %v136, %v140
  %v159 = vunpack.c.l.b16 %v120
  %v160 = vunpack.c.l.b16 %v121
  %v161 = vunpack.c.l.b16 %v122
  %v162 = vunpack.c.l.b16 %v123
  %v163 = vunpack.c.l.b16 %v124
  %v164 = vunpack.c.l.b16 %v125
  %v165 = vunpack.c.l.b16 %v126
  %v166 = vunpack.c.l.b16 %v127
  %v167 = vunpack.c.l.b16 %v128
  %v168 = vunpack.c.l.b16 %v129
  %v169 = vunpack.c.l.b16 %v130
  %v170 = vunpack.c.l.b16 %v131
  %v171 = vunpack.c.l.b16 %v132
  %v172 = vunpack.c.l.b16 %v133
  %v173 = vunpack.c.l.b16 %v134
  %v174 = vunpack.c.l.b16 %v135
  %v175 = vpack.c.b16 %v160, %v159
  %v176 = vpack.c.b16 %v162, %v161
  %v177 = vpack.c.b16 %v164, %v163
  %v178 = vpack.c.b16 %v166, %v165
  %v179 = vpack.c.b16 %v168, %v167
  %v180 = vpack.c.b16 %v170, %v169
  %v181 = vpack.c.b16 %v172, %v171
  %v182 = vpack.c.b16 %v174, %v173
  %191 = vmatprep.subr.bf16.mxu0 0
  %192 = vmatpush1.bf16.msra.mxu0 %v175
  %193 = vmatprep.subr.bf16.mxu0 0
  %194 = vmatpush1.bf16.msra.mxu0 %v176
  %195 = vmatprep.subr.bf16.mxu0 0
  %196 = vmatpush1.bf16.msra.mxu0 %v177
  %197 = vmatprep.subr.bf16.mxu0 0
  %198 = vmatpush1.bf16.msra.mxu0 %v178
  %199 = vmatprep.subr.bf16.mxu0 0
  %200 = vmatpush1.bf16.msra.mxu0 %v179
  %201 = vmatprep.subr.bf16.mxu0 0
  %202 = vmatpush1.bf16.msra.mxu0 %v180
  %203 = vmatprep.subr.bf16.mxu0 0
  %204 = vmatpush1.bf16.msra.mxu0 %v181
  %205 = vmatprep.subr.bf16.mxu0 0
  %206 = vmatpush1.bf16.msra.mxu0 %v182
  %207 = vmatprep.subr.bf16.mxu0 0
  %208 = vmatpush1.bf16.msra.mxu0 0
  %209 = vmatprep.subr.bf16.mxu0 0
  %210 = vmatpush1.bf16.msra.mxu0 0
  %211 = vmatprep.subr.bf16.mxu0 0
  %212 = vmatpush1.bf16.msra.mxu0 0
  %213 = vmatprep.subr.bf16.mxu0 0
  %214 = vmatpush1.bf16.msra.mxu0 0
  %215 = vmatprep.subr.bf16.mxu0 0
  %216 = vmatpush1.bf16.msra.mxu0 0
  %217 = vmatprep.subr.bf16.mxu0 0
  %218 = vmatpush1.bf16.msra.mxu0 0
  %219 = vmatprep.subr.bf16.mxu0 0
  %220 = vmatpush1.bf16.msra.mxu0 0
  %221 = vmatprep.subr.bf16.mxu0 0
  %222 = vmatpush1.bf16.msra.mxu0 0
  %223 = vmatprep.mubr.bf16.mxu0 0
  %224 = vmatmul.mubr.bf16.gmra.mrb[0].mxu0 %v119
  %v225 = vpop.f32.mrb[0].mxu0
  %v226 = vadd.f32 %v141, %v225
  %v227 = vpop.f32.mrb[0].mxu0
  %v228 = vpop.f32.mrb[0].mxu0
  %v229 = vpop.f32.mrb[0].mxu0
  %230 = vdwg.mxu0
  %v231 = vmax.f32 %v226, 0.0
  %v232 = vpack.c.bf16 %v231, %v231
  %v233 = vld [vmem:[%s5] sm:$0xf]
  %v234 = vld [vmem:[%s5 + $0x4] sm:$0xf]
  %v235 = vld [vmem:[%s5 + $0x8] sm:$0xf]
  %v236 = vld [vmem:[%s5 + $0xc] sm:$0xf]
  %v237 = vld [vmem:[%s5 + $0x10] sm:$0xf]
  %v238 = vld [vmem:[%s5 + $0x14] sm:$0xf]
  %v239 = vld [vmem:[%s5 + $0x18] sm:$0xf]
  %v240 = vld [vmem:[%s5 + $0x1c] sm:$0xf]
  %v241 = vld [vmem:[%s5 + $0x20] sm:$0xf]
  %v242 = vld [vmem:[%s5 + $0x24] sm:$0xf]
  %v243 = vld [vmem:[%s5 + $0x28] sm:$0xf]
  %v244 = vld [vmem:[%s5 + $0x2c] sm:$0xf]
  %v245 = vld [vmem:[%s5 + $0x30] sm:$0xf]
  %v246 = vld [vmem:[%s5 + $0x34] sm:$0xf]
  %v247 = vld [vmem:[%s5 + $0x38] sm:$0xf]
  %v248 = vld [vmem:[%s5 + $0x3c] sm:$0xf]
  %v249 = vld [vmem:[%s6] sm:$0x1]
  %v251 = vlaneseq
  %v252 = vshrl.u32 %v251, 7
  %v253 = vsub.s32 0, %v252
  %v254 = vrot.slane %v249, %v253
  %v272 = vunpack.c.l.b16 %v233
  %v273 = vunpack.c.l.b16 %v234
  %v274 = vunpack.c.l.b16 %v235
  %v275 = vunpack.c.l.b16 %v236
  %v276 = vunpack.c.l.b16 %v237
  %v277 = vunpack.c.l.b16 %v238
  %v278 = vunpack.c.l.b16 %v239
  %v279 = vunpack.c.l.b16 %v240
  %v280 = vunpack.c.l.b16 %v241
  %v281 = vunpack.c.l.b16 %v242
  %v282 = vunpack.c.l.b16 %v243
  %v283 = vunpack.c.l.b16 %v244
  %v284 = vunpack.c.l.b16 %v245
  %v285 = vunpack.c.l.b16 %v246
  %v286 = vunpack.c.l.b16 %v247
  %v287 = vunpack.c.l.b16 %v248
  %v288 = vpack.c.b16 %v273, %v272
  %v289 = vpack.c.b16 %v275, %v274
  %v290 = vpack.c.b16 %v277, %v276
  %v291 = vpack.c.b16 %v279, %v278
  %v292 = vpack.c.b16 %v281, %v280
  %v293 = vpack.c.b16 %v283, %v282
  %v294 = vpack.c.b16 %v285, %v284
  %v295 = vpack.c.b16 %v287, %v286
  %304 = vmatprep.subr.bf16.mxu0 0
  %305 = vmatpush1.bf16.msra.mxu0 %v288
  %306 = vmatprep.subr.bf16.mxu0 0
  %307 = vmatpush1.bf16.msra.mxu0 %v289
  %308 = vmatprep.subr.bf16.mxu0 0
  %309 = vmatpush1.bf16.msra.mxu0 %v290
  %310 = vmatprep.subr.bf16.mxu0 0
  %311 = vmatpush1.bf16.msra.mxu0 %v291
  %312 = vmatprep.subr.bf16.mxu0 0
  %313 = vmatpush1.bf16.msra.mxu0 %v292
  %314 = vmatprep.subr.bf16.mxu0 0
  %315 = vmatpush1.bf16.msra.mxu0 %v293
  %316 = vmatprep.subr.bf16.mxu0 0
  %317 = vmatpush1.bf16.msra.mxu0 %v294
  %318 = vmatprep.subr.bf16.mxu0 0
  %319 = vmatpush1.bf16.msra.mxu0 %v295
  %320 = vmatprep.subr.bf16.mxu0 0
  %321 = vmatpush1.bf16.msra.mxu0 0
  %322 = vmatprep.subr.bf16.mxu0 0
  %323 = vmatpush1.bf16.msra.mxu0 0
  %324 = vmatprep.subr.bf16.mxu0 0
  %325 = vmatpush1.bf16.msra.mxu0 0
  %326 = vmatprep.subr.bf16.mxu0 0
  %327 = vmatpush1.bf16.msra.mxu0 0
  %328 = vmatprep.subr.bf16.mxu0 0
  %329 = vmatpush1.bf16.msra.mxu0 0
  %330 = vmatprep.subr.bf16.mxu0 0
  %331 = vmatpush1.bf16.msra.mxu0 0
  %332 = vmatprep.subr.bf16.mxu0 0
  %333 = vmatpush1.bf16.msra.mxu0 0
  %334 = vmatprep.subr.bf16.mxu0 0
  %335 = vmatpush1.bf16.msra.mxu0 0
  %336 = vmatprep.mubr.bf16.mxu0 0
  %337 = vmatmul.mubr.bf16.gmra.mrb[0].mxu0 %v232
  %v338 = vpop.f32.mrb[0].mxu0
  %v339 = vadd.f32 %v254, %v338
  %v340 = vpop.f32.mrb[0].mxu0
  %v341 = vpop.f32.mrb[0].mxu0
  %v342 = vpop.f32.mrb[0].mxu0
  %343 = vdwg.mxu0
  %v344 = vadd.f32 %v339, %v118
  %v345 = vmax.f32 %v344, 0.0
  %v346 = vpack.c.bf16 %v345, %v345
  %v347 = vld [vmem:[%s7] sm:$0xf]
  %v348 = vld [vmem:[%s7 + $0x4] sm:$0xf]
  %v349 = vld [vmem:[%s7 + $0x8] sm:$0xf]
  %v350 = vld [vmem:[%s7 + $0xc] sm:$0xf]
  %v351 = vld [vmem:[%s7 + $0x10] sm:$0xf]
  %v352 = vld [vmem:[%s7 + $0x14] sm:$0xf]
  %v353 = vld [vmem:[%s7 + $0x18] sm:$0xf]
  %v354 = vld [vmem:[%s7 + $0x1c] sm:$0xf]
  %v355 = vld [vmem:[%s7 + $0x20] sm:$0xf]
  %v356 = vld [vmem:[%s7 + $0x24] sm:$0xf]
  %v357 = vld [vmem:[%s7 + $0x28] sm:$0xf]
  %v358 = vld [vmem:[%s7 + $0x2c] sm:$0xf]
  %v359 = vld [vmem:[%s7 + $0x30] sm:$0xf]
  %v360 = vld [vmem:[%s7 + $0x34] sm:$0xf]
  %v361 = vld [vmem:[%s7 + $0x38] sm:$0xf]
  %v362 = vld [vmem:[%s7 + $0x3c] sm:$0xf]
  %v363 = vld [vmem:[%s8] sm:$0x1]
  %v365 = vlaneseq
  %v366 = vshrl.u32 %v365, 7
  %v367 = vsub.s32 0, %v366
  %v368 = vrot.slane %v363, %v367
  %v386 = vunpack.c.l.b16 %v347
  %v387 = vunpack.c.l.b16 %v348
  %v388 = vunpack.c.l.b16 %v349
  %v389 = vunpack.c.l.b16 %v350
  %v390 = vunpack.c.l.b16 %v351
  %v391 = vunpack.c.l.b16 %v352
  %v392 = vunpack.c.l.b16 %v353
  %v393 = vunpack.c.l.b16 %v354
  %v394 = vunpack.c.l.b16 %v355
  %v395 = vunpack.c.l.b16 %v356
  %v396 = vunpack.c.l.b16 %v357
  %v397 = vunpack.c.l.b16 %v358
  %v398 = vunpack.c.l.b16 %v359
  %v399 = vunpack.c.l.b16 %v360
  %v400 = vunpack.c.l.b16 %v361
  %v401 = vunpack.c.l.b16 %v362
  %v402 = vpack.c.b16 %v387, %v386
  %v403 = vpack.c.b16 %v389, %v388
  %v404 = vpack.c.b16 %v391, %v390
  %v405 = vpack.c.b16 %v393, %v392
  %v406 = vpack.c.b16 %v395, %v394
  %v407 = vpack.c.b16 %v397, %v396
  %v408 = vpack.c.b16 %v399, %v398
  %v409 = vpack.c.b16 %v401, %v400
  %418 = vmatprep.subr.bf16.mxu0 0
  %419 = vmatpush1.bf16.msra.mxu0 %v402
  %420 = vmatprep.subr.bf16.mxu0 0
  %421 = vmatpush1.bf16.msra.mxu0 %v403
  %422 = vmatprep.subr.bf16.mxu0 0
  %423 = vmatpush1.bf16.msra.mxu0 %v404
  %424 = vmatprep.subr.bf16.mxu0 0
  %425 = vmatpush1.bf16.msra.mxu0 %v405
  %426 = vmatprep.subr.bf16.mxu0 0
  %427 = vmatpush1.bf16.msra.mxu0 %v406
  %428 = vmatprep.subr.bf16.mxu0 0
  %429 = vmatpush1.bf16.msra.mxu0 %v407
  %430 = vmatprep.subr.bf16.mxu0 0
  %431 = vmatpush1.bf16.msra.mxu0 %v408
  %432 = vmatprep.subr.bf16.mxu0 0
  %433 = vmatpush1.bf16.msra.mxu0 %v409
  %434 = vmatprep.subr.bf16.mxu0 0
  %435 = vmatpush1.bf16.msra.mxu0 0
  %436 = vmatprep.subr.bf16.mxu0 0
  %437 = vmatpush1.bf16.msra.mxu0 0
  %438 = vmatprep.subr.bf16.mxu0 0
  %439 = vmatpush1.bf16.msra.mxu0 0
  %440 = vmatprep.subr.bf16.mxu0 0
  %441 = vmatpush1.bf16.msra.mxu0 0
  %442 = vmatprep.subr.bf16.mxu0 0
  %443 = vmatpush1.bf16.msra.mxu0 0
  %444 = vmatprep.subr.bf16.mxu0 0
  %445 = vmatpush1.bf16.msra.mxu0 0
  %446 = vmatprep.subr.bf16.mxu0 0
  %447 = vmatpush1.bf16.msra.mxu0 0
  %448 = vmatprep.subr.bf16.mxu0 0
  %449 = vmatpush1.bf16.msra.mxu0 0
  %450 = vmatprep.mubr.bf16.mxu0 0
  %451 = vmatmul.mubr.bf16.gmra.mrb[0].mxu0 %v346
  %v452 = vpop.f32.mrb[0].mxu0
  %v453 = vadd.f32 %v368, %v452
  %v454 = vpop.f32.mrb[0].mxu0
  %v455 = vpop.f32.mrb[0].mxu0
  %v456 = vpop.f32.mrb[0].mxu0
  %457 = vdwg.mxu0
  %v458 = vmax.f32 %v453, 0.0
  %v459 = vpack.c.bf16 %v458, %v458
  %v460 = vld [vmem:[%s9] sm:$0xf]
  %v461 = vld [vmem:[%s9 + $0x4] sm:$0xf]
  %v462 = vld [vmem:[%s9 + $0x8] sm:$0xf]
  %v463 = vld [vmem:[%s9 + $0xc] sm:$0xf]
  %v464 = vld [vmem:[%s9 + $0x10] sm:$0xf]
  %v465 = vld [vmem:[%s9 + $0x14] sm:$0xf]
  %v466 = vld [vmem:[%s9 + $0x18] sm:$0xf]
  %v467 = vld [vmem:[%s9 + $0x1c] sm:$0xf]
  %v468 = vld [vmem:[%s9 + $0x20] sm:$0xf]
  %v469 = vld [vmem:[%s9 + $0x24] sm:$0xf]
  %v470 = vld [vmem:[%s9 + $0x28] sm:$0xf]
  %v471 = vld [vmem:[%s9 + $0x2c] sm:$0xf]
  %v472 = vld [vmem:[%s9 + $0x30] sm:$0xf]
  %v473 = vld [vmem:[%s9 + $0x34] sm:$0xf]
  %v474 = vld [vmem:[%s9 + $0x38] sm:$0xf]
  %v475 = vld [vmem:[%s9 + $0x3c] sm:$0xf]
  %v476 = vld [vmem:[%s10] sm:$0x1]
  %v478 = vlaneseq
  %v479 = vshrl.u32 %v478, 7
  %v480 = vsub.s32 0, %v479
  %v481 = vrot.slane %v476, %v480
  %v499 = vunpack.c.l.b16 %v460
  %v500 = vunpack.c.l.b16 %v461
  %v501 = vunpack.c.l.b16 %v462
  %v502 = vunpack.c.l.b16 %v463
  %v503 = vunpack.c.l.b16 %v464
  %v504 = vunpack.c.l.b16 %v465
  %v505 = vunpack.c.l.b16 %v466
  %v506 = vunpack.c.l.b16 %v467
  %v507 = vunpack.c.l.b16 %v468
  %v508 = vunpack.c.l.b16 %v469
  %v509 = vunpack.c.l.b16 %v470
  %v510 = vunpack.c.l.b16 %v471
  %v511 = vunpack.c.l.b16 %v472
  %v512 = vunpack.c.l.b16 %v473
  %v513 = vunpack.c.l.b16 %v474
  %v514 = vunpack.c.l.b16 %v475
  %v515 = vpack.c.b16 %v500, %v499
  %v516 = vpack.c.b16 %v502, %v501
  %v517 = vpack.c.b16 %v504, %v503
  %v518 = vpack.c.b16 %v506, %v505
  %v519 = vpack.c.b16 %v508, %v507
  %v520 = vpack.c.b16 %v510, %v509
  %v521 = vpack.c.b16 %v512, %v511
  %v522 = vpack.c.b16 %v514, %v513
  %531 = vmatprep.subr.bf16.mxu0 0
  %532 = vmatpush1.bf16.msra.mxu0 %v515
  %533 = vmatprep.subr.bf16.mxu0 0
  %534 = vmatpush1.bf16.msra.mxu0 %v516
  %535 = vmatprep.subr.bf16.mxu0 0
  %536 = vmatpush1.bf16.msra.mxu0 %v517
  %537 = vmatprep.subr.bf16.mxu0 0
  %538 = vmatpush1.bf16.msra.mxu0 %v518
  %539 = vmatprep.subr.bf16.mxu0 0
  %540 = vmatpush1.bf16.msra.mxu0 %v519
  %541 = vmatprep.subr.bf16.mxu0 0
  %542 = vmatpush1.bf16.msra.mxu0 %v520
  %543 = vmatprep.subr.bf16.mxu0 0
  %544 = vmatpush1.bf16.msra.mxu0 %v521
  %545 = vmatprep.subr.bf16.mxu0 0
  %546 = vmatpush1.bf16.msra.mxu0 %v522
  %547 = vmatprep.subr.bf16.mxu0 0
  %548 = vmatpush1.bf16.msra.mxu0 0
  %549 = vmatprep.subr.bf16.mxu0 0
  %550 = vmatpush1.bf16.msra.mxu0 0
  %551 = vmatprep.subr.bf16.mxu0 0
  %552 = vmatpush1.bf16.msra.mxu0 0
  %553 = vmatprep.subr.bf16.mxu0 0
  %554 = vmatpush1.bf16.msra.mxu0 0
  %555 = vmatprep.subr.bf16.mxu0 0
  %556 = vmatpush1.bf16.msra.mxu0 0
  %557 = vmatprep.subr.bf16.mxu0 0
  %558 = vmatpush1.bf16.msra.mxu0 0
  %559 = vmatprep.subr.bf16.mxu0 0
  %560 = vmatpush1.bf16.msra.mxu0 0
  %561 = vmatprep.subr.bf16.mxu0 0
  %562 = vmatpush1.bf16.msra.mxu0 0
  %563 = vmatprep.mubr.bf16.mxu0 0
  %564 = vmatmul.mubr.bf16.gmra.mrb[0].mxu0 %v459
  %v565 = vpop.f32.mrb[0].mxu0
  %v566 = vadd.f32 %v481, %v565
  %v567 = vpop.f32.mrb[0].mxu0
  %v568 = vpop.f32.mrb[0].mxu0
  %v569 = vpop.f32.mrb[0].mxu0
  %570 = vdwg.mxu0
  %v571 = vadd.f32 %v566, %v345
  %v572 = vmax.f32 %v571, 0.0
  %v573 = vpack.c.bf16 %v572, %v572
  %v574 = vld [vmem:[%s11] sm:$0xf]
  %v575 = vld [vmem:[%s11 + $0x4] sm:$0xf]
  %v576 = vld [vmem:[%s11 + $0x8] sm:$0xf]
  %v577 = vld [vmem:[%s11 + $0xc] sm:$0xf]
  %v578 = vld [vmem:[%s11 + $0x10] sm:$0xf]
  %v579 = vld [vmem:[%s11 + $0x14] sm:$0xf]
  %v580 = vld [vmem:[%s11 + $0x18] sm:$0xf]
  %v581 = vld [vmem:[%s11 + $0x1c] sm:$0xf]
  %v582 = vld [vmem:[%s11 + $0x20] sm:$0xf]
  %v583 = vld [vmem:[%s11 + $0x24] sm:$0xf]
  %v584 = vld [vmem:[%s11 + $0x28] sm:$0xf]
  %v585 = vld [vmem:[%s11 + $0x2c] sm:$0xf]
  %v586 = vld [vmem:[%s11 + $0x30] sm:$0xf]
  %v587 = vld [vmem:[%s11 + $0x34] sm:$0xf]
  %v588 = vld [vmem:[%s11 + $0x38] sm:$0xf]
  %v589 = vld [vmem:[%s11 + $0x3c] sm:$0xf]
  %v590 = vld [vmem:[%s12] sm:$0x1]
  %v592 = vlaneseq
  %v593 = vshrl.u32 %v592, 7
  %v594 = vsub.s32 0, %v593
  %v595 = vrot.slane %v590, %v594
  %v613 = vunpack.c.l.b16 %v574
  %v614 = vunpack.c.l.b16 %v575
  %v615 = vunpack.c.l.b16 %v576
  %v616 = vunpack.c.l.b16 %v577
  %v617 = vunpack.c.l.b16 %v578
  %v618 = vunpack.c.l.b16 %v579
  %v619 = vunpack.c.l.b16 %v580
  %v620 = vunpack.c.l.b16 %v581
  %v621 = vunpack.c.l.b16 %v582
  %v622 = vunpack.c.l.b16 %v583
  %v623 = vunpack.c.l.b16 %v584
  %v624 = vunpack.c.l.b16 %v585
  %v625 = vunpack.c.l.b16 %v586
  %v626 = vunpack.c.l.b16 %v587
  %v627 = vunpack.c.l.b16 %v588
  %v628 = vunpack.c.l.b16 %v589
  %v629 = vpack.c.b16 %v614, %v613
  %v630 = vpack.c.b16 %v616, %v615
  %v631 = vpack.c.b16 %v618, %v617
  %v632 = vpack.c.b16 %v620, %v619
  %v633 = vpack.c.b16 %v622, %v621
  %v634 = vpack.c.b16 %v624, %v623
  %v635 = vpack.c.b16 %v626, %v625
  %v636 = vpack.c.b16 %v628, %v627
  %645 = vmatprep.subr.bf16.mxu0 0
  %646 = vmatpush1.bf16.msra.mxu0 %v629
  %647 = vmatprep.subr.bf16.mxu0 0
  %648 = vmatpush1.bf16.msra.mxu0 %v630
  %649 = vmatprep.subr.bf16.mxu0 0
  %650 = vmatpush1.bf16.msra.mxu0 %v631
  %651 = vmatprep.subr.bf16.mxu0 0
  %652 = vmatpush1.bf16.msra.mxu0 %v632
  %653 = vmatprep.subr.bf16.mxu0 0
  %654 = vmatpush1.bf16.msra.mxu0 %v633
  %655 = vmatprep.subr.bf16.mxu0 0
  %656 = vmatpush1.bf16.msra.mxu0 %v634
  %657 = vmatprep.subr.bf16.mxu0 0
  %658 = vmatpush1.bf16.msra.mxu0 %v635
  %659 = vmatprep.subr.bf16.mxu0 0
  %660 = vmatpush1.bf16.msra.mxu0 %v636
  %661 = vmatprep.subr.bf16.mxu0 0
  %662 = vmatpush1.bf16.msra.mxu0 0
  %663 = vmatprep.subr.bf16.mxu0 0
  %664 = vmatpush1.bf16.msra.mxu0 0
  %665 = vmatprep.subr.bf16.mxu0 0
  %666 = vmatpush1.bf16.msra.mxu0 0
  %667 = vmatprep.subr.bf16.mxu0 0
  %668 = vmatpush1.bf16.msra.mxu0 0
  %669 = vmatprep.subr.bf16.mxu0 0
  %670 = vmatpush1.bf16.msra.mxu0 0
  %671 = vmatprep.subr.bf16.mxu0 0
  %672 = vmatpush1.bf16.msra.mxu0 0
  %673 = vmatprep.subr.bf16.mxu0 0
  %674 = vmatpush1.bf16.msra.mxu0 0
  %675 = vmatprep.subr.bf16.mxu0 0
  %676 = vmatpush1.bf16.msra.mxu0 0
  %677 = vmatprep.mubr.bf16.mxu0 0
  %678 = vmatmul.mubr.bf16.gmra.mrb[0].mxu0 %v573
  %v679 = vpop.f32.mrb[0].mxu0
  %v680 = vadd.f32 %v595, %v679
  %v681 = vpop.f32.mrb[0].mxu0
  %v682 = vpop.f32.mrb[0].mxu0
  %v683 = vpop.f32.mrb[0].mxu0
  %684 = vdwg.mxu0
  %v685 = vmax.f32 %v680, 0.0
  %v686 = vpack.c.bf16 %v685, %v685
  %v687 = vld [vmem:[%s13] sm:$0xf]
  %v688 = vld [vmem:[%s13 + $0x4] sm:$0xf]
  %v689 = vld [vmem:[%s13 + $0x8] sm:$0xf]
  %v690 = vld [vmem:[%s13 + $0xc] sm:$0xf]
  %v691 = vld [vmem:[%s13 + $0x10] sm:$0xf]
  %v692 = vld [vmem:[%s13 + $0x14] sm:$0xf]
  %v693 = vld [vmem:[%s13 + $0x18] sm:$0xf]
  %v694 = vld [vmem:[%s13 + $0x1c] sm:$0xf]
  %v695 = vld [vmem:[%s13 + $0x20] sm:$0xf]
  %v696 = vld [vmem:[%s13 + $0x24] sm:$0xf]
  %v697 = vld [vmem:[%s13 + $0x28] sm:$0xf]
  %v698 = vld [vmem:[%s13 + $0x2c] sm:$0xf]
  %v699 = vld [vmem:[%s13 + $0x30] sm:$0xf]
  %v700 = vld [vmem:[%s13 + $0x34] sm:$0xf]
  %v701 = vld [vmem:[%s13 + $0x38] sm:$0xf]
  %v702 = vld [vmem:[%s13 + $0x3c] sm:$0xf]
  %v703 = vld [vmem:[%s14] sm:$0x1]
  %v705 = vlaneseq
  %v706 = vshrl.u32 %v705, 7
  %v707 = vsub.s32 0, %v706
  %v708 = vrot.slane %v703, %v707
  %v726 = vunpack.c.l.b16 %v687
  %v727 = vunpack.c.l.b16 %v688
  %v728 = vunpack.c.l.b16 %v689
  %v729 = vunpack.c.l.b16 %v690
  %v730 = vunpack.c.l.b16 %v691
  %v731 = vunpack.c.l.b16 %v692
  %v732 = vunpack.c.l.b16 %v693
  %v733 = vunpack.c.l.b16 %v694
  %v734 = vunpack.c.l.b16 %v695
  %v735 = vunpack.c.l.b16 %v696
  %v736 = vunpack.c.l.b16 %v697
  %v737 = vunpack.c.l.b16 %v698
  %v738 = vunpack.c.l.b16 %v699
  %v739 = vunpack.c.l.b16 %v700
  %v740 = vunpack.c.l.b16 %v701
  %v741 = vunpack.c.l.b16 %v702
  %v742 = vpack.c.b16 %v727, %v726
  %v743 = vpack.c.b16 %v729, %v728
  %v744 = vpack.c.b16 %v731, %v730
  %v745 = vpack.c.b16 %v733, %v732
  %v746 = vpack.c.b16 %v735, %v734
  %v747 = vpack.c.b16 %v737, %v736
  %v748 = vpack.c.b16 %v739, %v738
  %v749 = vpack.c.b16 %v741, %v740
  %758 = vmatprep.subr.bf16.mxu0 0
  %759 = vmatpush1.bf16.msra.mxu0 %v742
  %760 = vmatprep.subr.bf16.mxu0 0
  %761 = vmatpush1.bf16.msra.mxu0 %v743
  %762 = vmatprep.subr.bf16.mxu0 0
  %763 = vmatpush1.bf16.msra.mxu0 %v744
  %764 = vmatprep.subr.bf16.mxu0 0
  %765 = vmatpush1.bf16.msra.mxu0 %v745
  %766 = vmatprep.subr.bf16.mxu0 0
  %767 = vmatpush1.bf16.msra.mxu0 %v746
  %768 = vmatprep.subr.bf16.mxu0 0
  %769 = vmatpush1.bf16.msra.mxu0 %v747
  %770 = vmatprep.subr.bf16.mxu0 0
  %771 = vmatpush1.bf16.msra.mxu0 %v748
  %772 = vmatprep.subr.bf16.mxu0 0
  %773 = vmatpush1.bf16.msra.mxu0 %v749
  %774 = vmatprep.subr.bf16.mxu0 0
  %775 = vmatpush1.bf16.msra.mxu0 0
  %776 = vmatprep.subr.bf16.mxu0 0
  %777 = vmatpush1.bf16.msra.mxu0 0
  %778 = vmatprep.subr.bf16.mxu0 0
  %779 = vmatpush1.bf16.msra.mxu0 0
  %780 = vmatprep.subr.bf16.mxu0 0
  %781 = vmatpush1.bf16.msra.mxu0 0
  %782 = vmatprep.subr.bf16.mxu0 0
  %783 = vmatpush1.bf16.msra.mxu0 0
  %784 = vmatprep.subr.bf16.mxu0 0
  %785 = vmatpush1.bf16.msra.mxu0 0
  %786 = vmatprep.subr.bf16.mxu0 0
  %787 = vmatpush1.bf16.msra.mxu0 0
  %788 = vmatprep.subr.bf16.mxu0 0
  %789 = vmatpush1.bf16.msra.mxu0 0
  %790 = vmatprep.mubr.bf16.mxu0 0
  %791 = vmatmul.mubr.bf16.gmra.mrb[0].mxu0 %v686
  %v792 = vpop.f32.mrb[0].mxu0
  %v793 = vadd.f32 %v708, %v792
  %v794 = vpop.f32.mrb[0].mxu0
  %v795 = vpop.f32.mrb[0].mxu0
  %v796 = vpop.f32.mrb[0].mxu0
  %797 = vdwg.mxu0
  %v798 = vadd.f32 %v793, %v572
  %v799 = vmax.f32 %v798, 0.0
  %v800 = vpack.c.bf16 %v799, %v799
  %v801 = vld [vmem:[%s15] sm:$0xf]
  %v802 = vld [vmem:[%s15 + $0x4] sm:$0xf]
  %v803 = vld [vmem:[%s15 + $0x8] sm:$0xf]
  %v804 = vld [vmem:[%s15 + $0xc] sm:$0xf]
  %v805 = vld [vmem:[%s15 + $0x10] sm:$0xf]
  %v806 = vld [vmem:[%s15 + $0x14] sm:$0xf]
  %v807 = vld [vmem:[%s15 + $0x18] sm:$0xf]
  %v808 = vld [vmem:[%s15 + $0x1c] sm:$0xf]
  %v809 = vld [vmem:[%s15 + $0x20] sm:$0xf]
  %v810 = vld [vmem:[%s15 + $0x24] sm:$0xf]
  %v811 = vld [vmem:[%s15 + $0x28] sm:$0xf]
  %v812 = vld [vmem:[%s15 + $0x2c] sm:$0xf]
  %v813 = vld [vmem:[%s15 + $0x30] sm:$0xf]
  %v814 = vld [vmem:[%s15 + $0x34] sm:$0xf]
  %v815 = vld [vmem:[%s15 + $0x38] sm:$0xf]
  %v816 = vld [vmem:[%s15 + $0x3c] sm:$0xf]
  %v817 = vld [vmem:[%s16] sm:$0x1]
  %v819 = vlaneseq
  %v820 = vshrl.u32 %v819, 7
  %v821 = vsub.s32 0, %v820
  %v822 = vrot.slane %v817, %v821
  %v840 = vunpack.c.l.b16 %v801
  %v841 = vunpack.c.l.b16 %v802
  %v842 = vunpack.c.l.b16 %v803
  %v843 = vunpack.c.l.b16 %v804
  %v844 = vunpack.c.l.b16 %v805
  %v845 = vunpack.c.l.b16 %v806
  %v846 = vunpack.c.l.b16 %v807
  %v847 = vunpack.c.l.b16 %v808
  %v848 = vunpack.c.l.b16 %v809
  %v849 = vunpack.c.l.b16 %v810
  %v850 = vunpack.c.l.b16 %v811
  %v851 = vunpack.c.l.b16 %v812
  %v852 = vunpack.c.l.b16 %v813
  %v853 = vunpack.c.l.b16 %v814
  %v854 = vunpack.c.l.b16 %v815
  %v855 = vunpack.c.l.b16 %v816
  %v856 = vpack.c.b16 %v841, %v840
  %v857 = vpack.c.b16 %v843, %v842
  %v858 = vpack.c.b16 %v845, %v844
  %v859 = vpack.c.b16 %v847, %v846
  %v860 = vpack.c.b16 %v849, %v848
  %v861 = vpack.c.b16 %v851, %v850
  %v862 = vpack.c.b16 %v853, %v852
  %v863 = vpack.c.b16 %v855, %v854
  %872 = vmatprep.subr.bf16.mxu0 0
  %873 = vmatpush1.bf16.msra.mxu0 %v856
  %874 = vmatprep.subr.bf16.mxu0 0
  %875 = vmatpush1.bf16.msra.mxu0 %v857
  %876 = vmatprep.subr.bf16.mxu0 0
  %877 = vmatpush1.bf16.msra.mxu0 %v858
  %878 = vmatprep.subr.bf16.mxu0 0
  %879 = vmatpush1.bf16.msra.mxu0 %v859
  %880 = vmatprep.subr.bf16.mxu0 0
  %881 = vmatpush1.bf16.msra.mxu0 %v860
  %882 = vmatprep.subr.bf16.mxu0 0
  %883 = vmatpush1.bf16.msra.mxu0 %v861
  %884 = vmatprep.subr.bf16.mxu0 0
  %885 = vmatpush1.bf16.msra.mxu0 %v862
  %886 = vmatprep.subr.bf16.mxu0 0
  %887 = vmatpush1.bf16.msra.mxu0 %v863
  %888 = vmatprep.subr.bf16.mxu0 0
  %889 = vmatpush1.bf16.msra.mxu0 0
  %890 = vmatprep.subr.bf16.mxu0 0
  %891 = vmatpush1.bf16.msra.mxu0 0
  %892 = vmatprep.subr.bf16.mxu0 0
  %893 = vmatpush1.bf16.msra.mxu0 0
  %894 = vmatprep.subr.bf16.mxu0 0
  %895 = vmatpush1.bf16.msra.mxu0 0
  %896 = vmatprep.subr.bf16.mxu0 0
  %897 = vmatpush1.bf16.msra.mxu0 0
  %898 = vmatprep.subr.bf16.mxu0 0
  %899 = vmatpush1.bf16.msra.mxu0 0
  %900 = vmatprep.subr.bf16.mxu0 0
  %901 = vmatpush1.bf16.msra.mxu0 0
  %902 = vmatprep.subr.bf16.mxu0 0
  %903 = vmatpush1.bf16.msra.mxu0 0
  %904 = vmatprep.mubr.bf16.mxu0 0
  %905 = vmatmul.mubr.bf16.gmra.mrb[0].mxu0 %v800
  %v906 = vpop.f32.mrb[0].mxu0
  %v907 = vadd.f32 %v822, %v906
  %v908 = vpop.f32.mrb[0].mxu0
  %v909 = vpop.f32.mrb[0].mxu0
  %v910 = vpop.f32.mrb[0].mxu0
  %911 = vdwg.mxu0
  %v912 = vmul.f32 %v907, 0.5
  %v913 = vtanh.pop %v912
  %v914 = vmul.f32 %v913, 0.5
  %v915 = vadd.f32 %v914, 0.5
  %916 = vst [vmem:[%s17] sm:$0xff] %v915
  // Predicated region
  $region70: #{actor_resnet9.1} parent=0 // pred_check
    _
  $region71: #{actor_resnet9.1} parent=0 // pred_check_branch
    %918 = sbr.rel (0) target = $region73
  $region72: #{actor_resnet9.1} parent=0 // pred_region
    _
  $region73: #{actor_resnet9.1} parent=0 // pred_fallthru
    _
  // Predicated region
  $region74: #{actor_resnet9.1} parent=0 // pred_check
    _
  $region75: #{actor_resnet9.1} parent=0 // pred_check_branch
    %920 = sbr.rel (0) target = $region77
  $region76: #{actor_resnet9.1} parent=0 // pred_region
    _
  $region77: #{actor_resnet9.1} parent=0 // pred_fallthru
    _

</llo_original>
